<compile_context>
chip_gen: v7x
topology: tpu7x:2x2x1
jax: 0.10.0
libtpu: 0.0.40
codegen_flags: <defaults>
</compile_context>

<pallas_src>
import jax
import jax.numpy as jnp
from jax.experimental import pallas as pl
from jax.experimental.pallas import tpu as pltpu

NEG_SLOPE = 0.01
D_IN, D_H1, D_H2, D_OUT = 210, 100, 50, 10
# Lane-padded (multiple-of-128) hidden / weight-output sizes (zero-padded weights
# keep the padded lanes exactly zero through the whole network).
D_H1_P, D_H2_P, D_OUT_P = 128, 128, 128
# Max batch-tile rows: amortizes per-grid-step overhead; (2048, 210) f32 input
# block double-buffered (~3.4 MiB) + f32 temporaries stay well under v5e's
# 16 MiB scoped-VMEM default.
TB_MAX = 2048


def _round_up(x, m):
    return (x + m - 1) // m * m


def _leaky_relu(x):
    return jnp.where(x > 0, x, NEG_SLOPE * x)


def mlp_kernel(x_ref, w1_ref, b1_ref, w2_ref, b2_ref, w3_ref, b3_ref, o_ref):
    # Cast the streamed f32 input tile to bf16 for the MXU (accumulate in f32).
    x = x_ref[...].astype(jnp.bfloat16)
    # fc_layer1: Linear(210, 100) + LeakyReLU (+ Dropout = identity in eval)
    h1 = jnp.dot(x, w1_ref[...], preferred_element_type=jnp.float32)
    h1 = _leaky_relu(h1 + b1_ref[...])
    # fc_layer2: Linear(100, 50) + LeakyReLU (+ Dropout = identity in eval)
    h2 = jnp.dot(h1.astype(jnp.bfloat16), w2_ref[...],
                 preferred_element_type=jnp.float32)
    h2 = _leaky_relu(h2 + b2_ref[...])
    # fc_layer3: Linear(50, 10) — only the first 10 lanes are real; store them.
    out = jnp.dot(h2.astype(jnp.bfloat16), w3_ref[...],
                  preferred_element_type=jnp.float32)
    o_ref[...] = (out + b3_ref[...])[:, :D_OUT]


def init_params(key):
    """PyTorch-Linear-style init: U(-1/sqrt(fan_in), +1/sqrt(fan_in)), W stored (in, out)."""
    def linear(key, fan_in, fan_out):
        kw, kb = jax.random.split(key)
        bound = 1.0 / jnp.sqrt(fan_in)
        w = jax.random.uniform(kw, (fan_in, fan_out), jnp.float32, -bound, bound)
        b = jax.random.uniform(kb, (1, fan_out), jnp.float32, -bound, bound)
        return w, b

    k1, k2, k3 = jax.random.split(key, 3)
    w1, b1 = linear(k1, D_IN, D_H1)
    w2, b2 = linear(k2, D_H1, D_H2)
    w3, b3 = linear(k3, D_H2, D_OUT)
    return (w1, b1, w2, b2, w3, b3)


def prepare_params(params):
    """One-time prep: weights -> bf16 zero-padded to lane-dense N (and K for layers 2/3),
    biases stay f32 zero-padded to 128 lanes. w1 keeps its natural K=210."""
    w1, b1, w2, b2, w3, b3 = params

    def pad_w(w, k_p, n_p):
        return jnp.pad(w.astype(jnp.bfloat16),
                       ((0, k_p - w.shape[0]), (0, n_p - w.shape[1])))

    def pad_b(b, n_p):
        return jnp.pad(b.astype(jnp.float32), ((0, 0), (0, n_p - b.shape[1])))

    return (pad_w(w1, D_IN, D_H1_P), pad_b(b1, D_H1_P),
            pad_w(w2, D_H1_P, D_H2_P), pad_b(b2, D_H2_P),
            pad_w(w3, D_H2_P, D_OUT_P), pad_b(b3, D_OUT_P))


def number_detector_forward(x, kparams):
    """x: any shape with trailing elements divisible by 210. Returns (B, 10) float32."""
    x2d = jnp.reshape(x, (-1, D_IN)).astype(jnp.float32)
    B = x2d.shape[0]
    w1, b1, w2, b2, w3, b3 = kparams

    # Batch tile: multiple of 8 sublanes; no batch padding — the last (partial)
    # grid block is masked by Pallas on both the input read and the output write.
    TB = min(TB_MAX, _round_up(B, 8))
    grid = (pl.cdiv(B, TB),)

    out = pl.pallas_call(
        mlp_kernel,
        out_shape=jax.ShapeDtypeStruct((B, D_OUT), jnp.float32),
        grid=grid,
        in_specs=[
            pl.BlockSpec((TB, D_IN), lambda i: (i, 0)),        # x: streamed per tile (f32)
            pl.BlockSpec((D_IN, D_H1_P), lambda i: (0, 0)),    # weights/biases: resident
            pl.BlockSpec((1, D_H1_P), lambda i: (0, 0)),
            pl.BlockSpec((D_H1_P, D_H2_P), lambda i: (0, 0)),
            pl.BlockSpec((1, D_H2_P), lambda i: (0, 0)),
            pl.BlockSpec((D_H2_P, D_OUT_P), lambda i: (0, 0)),
            pl.BlockSpec((1, D_OUT_P), lambda i: (0, 0)),
        ],
        out_specs=pl.BlockSpec((TB, D_OUT), lambda i: (i, 0)),  # last dim == full dim (10)
        compiler_params=pltpu.CompilerParams(
            dimension_semantics=("parallel",)),
    )(x2d, w1, b1, w2, b2, w3, b3)

    return out


def reference_forward(x, params):
    """Pure-JAX reference mirroring the kernel's bf16-operand / f32-accumulate math."""
    x2d = jnp.reshape(x, (-1, D_IN))
    w1, b1, w2, b2, w3, b3 = params
    h1 = _leaky_relu(jnp.dot(x2d.astype(jnp.bfloat16), w1.astype(jnp.bfloat16),
                             preferred_element_type=jnp.float32) + b1)
    h2 = _leaky_relu(jnp.dot(h1.astype(jnp.bfloat16), w2.astype(jnp.bfloat16),
                             preferred_element_type=jnp.float32) + b2)
    return jnp.dot(h2.astype(jnp.bfloat16), w3.astype(jnp.bfloat16),
                   preferred_element_type=jnp.float32) + b3


if __name__ == "__main__":
    key = jax.random.PRNGKey(0)
    kx, kp = jax.random.split(key)

    params = init_params(kp)
    kparams = prepare_params(params)

    # batch=8: single exact tile; batch=300: single partial (masked tail) tile;
    # batch=2500: multi-tile grid with a partial last block (exercises masking
    # on both the f32 input read and the narrow (TB,10) output store).
    for batch in (8, 300, 2500):
        x = jax.random.normal(jax.random.fold_in(kx, batch), (batch, D_IN),
                              dtype=jnp.float32)
        out = jax.block_until_ready(number_detector_forward(x, kparams))
        ref = reference_forward(x, params)
        assert out.shape == (batch, D_OUT), out.shape
        assert jnp.allclose(out, ref, atol=2e-3, rtol=2e-3), \
            f"mismatch vs reference at batch={batch}"

    print("KERNEL_OK")
</pallas_src>

<mosaic_0001>
module attributes {stable_mosaic.version = 11 : i64} {
  func.func @mlp_kernel(%arg0: i32, %arg1: memref<8x210xf32, #tpu.memory_space<vmem>>, %arg2: memref<210x128xbf16, #tpu.memory_space<vmem>>, %arg3: memref<1x128xf32, #tpu.memory_space<vmem>>, %arg4: memref<128x128xbf16, #tpu.memory_space<vmem>>, %arg5: memref<1x128xf32, #tpu.memory_space<vmem>>, %arg6: memref<128x128xbf16, #tpu.memory_space<vmem>>, %arg7: memref<1x128xf32, #tpu.memory_space<vmem>>, %arg8: memref<8x10xf32, #tpu.memory_space<vmem>>) attributes {dimension_semantics = [#tpu.dimension_semantics<parallel>], iteration_bounds = array<i64: 1>, scalar_prefetch = 0 : i64, scratch_operands = 0 : i64, tpu.core_type = #tpu.core_type<tc>, window_params = [{transform_indices = @transform_0, window_bounds = array<i64: 8, 210>}, {pipeline_mode = #tpu.pipeline_mode<synchronous>, transform_indices = @transform_1, window_bounds = array<i64: 210, 128>}, {pipeline_mode = #tpu.pipeline_mode<synchronous>, transform_indices = @transform_2, window_bounds = array<i64: 1, 128>}, {pipeline_mode = #tpu.pipeline_mode<synchronous>, transform_indices = @transform_3, window_bounds = array<i64: 128, 128>}, {pipeline_mode = #tpu.pipeline_mode<synchronous>, transform_indices = @transform_4, window_bounds = array<i64: 1, 128>}, {pipeline_mode = #tpu.pipeline_mode<synchronous>, transform_indices = @transform_5, window_bounds = array<i64: 128, 128>}, {pipeline_mode = #tpu.pipeline_mode<synchronous>, transform_indices = @transform_6, window_bounds = array<i64: 1, 128>}, {transform_indices = @transform_7, window_bounds = array<i64: 8, 10>}]} {
    %c0 = arith.constant 0 : index
    %c0_0 = arith.constant 0 : index
    %0 = vector.load %arg1[%c0, %c0_0] : memref<8x210xf32, #tpu.memory_space<vmem>>, vector<8x210xf32>
    %1 = arith.truncf %0 : vector<8x210xf32> to vector<8x210xbf16>
    %c0_1 = arith.constant 0 : index
    %c0_2 = arith.constant 0 : index
    %2 = vector.load %arg2[%c0_1, %c0_2] : memref<210x128xbf16, #tpu.memory_space<vmem>>, vector<210x128xbf16>
    %cst = arith.constant dense<0.000000e+00> : vector<8x128xf32>
    %3 = tpu.matmul %1, %2, %cst {dimension_numbers = #tpu.dot_dimension_numbers<[1], [0], [0], [1], [0, 0, 1, 1], [], []>} : vector<8x210xbf16>, vector<210x128xbf16>, vector<8x128xf32> -> vector<8x128xf32>
    %c0_3 = arith.constant 0 : index
    %c0_4 = arith.constant 0 : index
    %4 = vector.load %arg3[%c0_3, %c0_4] : memref<1x128xf32, #tpu.memory_space<vmem>>, vector<1x128xf32>
    %5 = vector.broadcast %4 : vector<1x128xf32> to vector<8x128xf32>
    %6 = arith.addf %3, %5 : vector<8x128xf32>
    %cst_5 = arith.constant 0.000000e+00 : f32
    %7 = vector.broadcast %cst_5 : f32 to vector<8x128xf32>
    %8 = arith.cmpf ogt, %6, %7 : vector<8x128xf32>
    %cst_6 = arith.constant 0.00999999977 : f32
    %9 = vector.broadcast %cst_6 : f32 to vector<8x128xf32>
    %10 = arith.mulf %9, %6 : vector<8x128xf32>
    %11 = arith.select %8, %6, %10 : vector<8x128xi1>, vector<8x128xf32>
    %12 = arith.truncf %11 : vector<8x128xf32> to vector<8x128xbf16>
    %c0_7 = arith.constant 0 : index
    %c0_8 = arith.constant 0 : index
    %13 = vector.load %arg4[%c0_7, %c0_8] : memref<128x128xbf16, #tpu.memory_space<vmem>>, vector<128x128xbf16>
    %cst_9 = arith.constant dense<0.000000e+00> : vector<8x128xf32>
    %14 = tpu.matmul %12, %13, %cst_9 {dimension_numbers = #tpu.dot_dimension_numbers<[1], [0], [0], [1], [0, 0, 1, 1], [], []>} : vector<8x128xbf16>, vector<128x128xbf16>, vector<8x128xf32> -> vector<8x128xf32>
    %c0_10 = arith.constant 0 : index
    %c0_11 = arith.constant 0 : index
    %15 = vector.load %arg5[%c0_10, %c0_11] : memref<1x128xf32, #tpu.memory_space<vmem>>, vector<1x128xf32>
    %16 = vector.broadcast %15 : vector<1x128xf32> to vector<8x128xf32>
    %17 = arith.addf %14, %16 : vector<8x128xf32>
    %cst_12 = arith.constant 0.000000e+00 : f32
    %18 = vector.broadcast %cst_12 : f32 to vector<8x128xf32>
    %19 = arith.cmpf ogt, %17, %18 : vector<8x128xf32>
    %cst_13 = arith.constant 0.00999999977 : f32
    %20 = vector.broadcast %cst_13 : f32 to vector<8x128xf32>
    %21 = arith.mulf %20, %17 : vector<8x128xf32>
    %22 = arith.select %19, %17, %21 : vector<8x128xi1>, vector<8x128xf32>
    %23 = arith.truncf %22 : vector<8x128xf32> to vector<8x128xbf16>
    %c0_14 = arith.constant 0 : index
    %c0_15 = arith.constant 0 : index
    %24 = vector.load %arg6[%c0_14, %c0_15] : memref<128x128xbf16, #tpu.memory_space<vmem>>, vector<128x128xbf16>
    %cst_16 = arith.constant dense<0.000000e+00> : vector<8x128xf32>
    %25 = tpu.matmul %23, %24, %cst_16 {dimension_numbers = #tpu.dot_dimension_numbers<[1], [0], [0], [1], [0, 0, 1, 1], [], []>} : vector<8x128xbf16>, vector<128x128xbf16>, vector<8x128xf32> -> vector<8x128xf32>
    %c0_17 = arith.constant 0 : index
    %c0_18 = arith.constant 0 : index
    %26 = vector.load %arg7[%c0_17, %c0_18] : memref<1x128xf32, #tpu.memory_space<vmem>>, vector<1x128xf32>
    %27 = vector.broadcast %26 : vector<1x128xf32> to vector<8x128xf32>
    %28 = arith.addf %25, %27 : vector<8x128xf32>
    %29 = vector.extract_strided_slice %28 {offsets = [0, 0], sizes = [8, 10], strides = [1, 1]} : vector<8x128xf32> to vector<8x10xf32>
    %c0_19 = arith.constant 0 : index
    %c0_20 = arith.constant 0 : index
    %30 = vector.load %arg8[%c0_19, %c0_20] : memref<8x10xf32, #tpu.memory_space<vmem>>, vector<8x10xf32>
    tpu.vector_store %arg8[%c0_19, %c0_20], %29 {strides = array<i32>} : memref<8x10xf32, #tpu.memory_space<vmem>>, vector<8x10xf32>,
    return
  }
  func.func @transform_0(%arg0: i32) -> (i32, i32) {
    %c0_i32 = arith.constant 0 : i32
    %c0_i32_0 = arith.constant 0 : i32
    return %arg0, %c0_i32 : i32, i32
  }
  func.func @transform_1(%arg0: i32) -> (i32, i32) {
    %c0_i32 = arith.constant 0 : i32
    %c0_i32_0 = arith.constant 0 : i32
    %c0_i32_1 = arith.constant 0 : i32
    return %c0_i32, %c0_i32_0 : i32, i32
  }
  func.func @transform_2(%arg0: i32) -> (i32, i32) {
    %c0_i32 = arith.constant 0 : i32
    %c0_i32_0 = arith.constant 0 : i32
    %c0_i32_1 = arith.constant 0 : i32
    return %c0_i32, %c0_i32_0 : i32, i32
  }
  func.func @transform_3(%arg0: i32) -> (i32, i32) {
    %c0_i32 = arith.constant 0 : i32
    %c0_i32_0 = arith.constant 0 : i32
    %c0_i32_1 = arith.constant 0 : i32
    return %c0_i32, %c0_i32_0 : i32, i32
  }
  func.func @transform_4(%arg0: i32) -> (i32, i32) {
    %c0_i32 = arith.constant 0 : i32
    %c0_i32_0 = arith.constant 0 : i32
    %c0_i32_1 = arith.constant 0 : i32
    return %c0_i32, %c0_i32_0 : i32, i32
  }
  func.func @transform_5(%arg0: i32) -> (i32, i32) {
    %c0_i32 = arith.constant 0 : i32
    %c0_i32_0 = arith.constant 0 : i32
    %c0_i32_1 = arith.constant 0 : i32
    return %c0_i32, %c0_i32_0 : i32, i32
  }
  func.func @transform_6(%arg0: i32) -> (i32, i32) {
    %c0_i32 = arith.constant 0 : i32
    %c0_i32_0 = arith.constant 0 : i32
    %c0_i32_1 = arith.constant 0 : i32
    return %c0_i32, %c0_i32_0 : i32, i32
  }
  func.func @transform_7(%arg0: i32) -> (i32, i32) {
    %c0_i32 = arith.constant 0 : i32
    %c0_i32_0 = arith.constant 0 : i32
    return %arg0, %c0_i32 : i32, i32
  }
}

</mosaic_0001>

<llo_original>
// kernel: tpu_custom_call.1
$region0: #{tpu_custom_call.1}
  #allocation0 [shape = 'u32[]', space=smem, size = 0x4, offset = 0x4, fixed_abs, tag = 'smem constant byte address 0x4 - core index']
  #allocation1 [shape = 'u32[144,128]{1,0:T(1,128)}', space=vmem, size = 0x12000, scoped, tag = 'internal scratch']
  %s0 = inlined_call_operand.hbm [shape: f32[8,210], index: 0, kind: input, shape index: {}]
  %s1 = inlined_call_operand.hbm [shape: bf16[210,128], index: 1, kind: input, shape index: {}]
  %s2 = inlined_call_operand.vmem [shape: f32[1,128], index: 2, kind: input, shape index: {}]
  %s3 = inlined_call_operand.hbm [shape: bf16[128,128], index: 3, kind: input, shape index: {}]
  %s4 = inlined_call_operand.vmem [shape: f32[1,128], index: 4, kind: input, shape index: {}]
  %s5 = inlined_call_operand.hbm [shape: bf16[128,128], index: 5, kind: input, shape index: {}]
  %s6 = inlined_call_operand.vmem [shape: f32[1,128], index: 6, kind: input, shape index: {}]
  %s7 = inlined_call_operand.hbm [shape: f32[8,10], index: 7, kind: output, shape index: {}]
  %s8 = sld [smem:[#allocation0]]
  $region54: #{tpu_custom_call.1} parent=0
    _
  %s10 = ssub.s32 1, %s8
  %s11 = scalar_select 0, %s10, %s8
  $region1: #{tpu_custom_call.1} parent=0
    #allocation2 [shape = 'u8[8192]{0}', space=vmem, size = 0x2000, scoped, tag = 'input window, operand 0, single buffered']
    #allocation3 [shape = 's32[1]{0}', space=sflag, size = 0x4, scoped, tag = 'scoped memory for tpu_custom_call.1']
    #allocation4 [shape = 's32[1]{0}', space=sflag, size = 0x4, scoped, tag = 'scoped memory for tpu_custom_call.1']
    #allocation5 [shape = 'u8[55296]{0}', space=vmem, size = 0xd800, scoped, tag = 'input window, operand 1, single buffered']
    #allocation6 [shape = 's32[1]{0}', space=sflag, size = 0x4, scoped, tag = 'scoped memory for tpu_custom_call.1']
    #allocation7 [shape = 'u8[32768]{0}', space=vmem, size = 0x8000, scoped, tag = 'input window, operand 3, single buffered']
    #allocation8 [shape = 'u8[32768]{0}', space=vmem, size = 0x8000, scoped, tag = 'input window, operand 5, single buffered']
    #allocation9 [shape = 's32[1]{0}', space=sflag, size = 0x4, scoped, tag = 'scoped memory for tpu_custom_call.1']
    #allocation10 [shape = 'u8[4096]{0}', space=vmem, size = 0x1000, scoped, tag = 'output window, operand 0, single buffered']
    %12 = vsyncpa [#allocation3], 0
    %13 = vsyncpa [#allocation6], 0
    %14 = vsyncpa [#allocation9], 0
    %15 = vsyncpa [#allocation4], 0
    // Predicated region
    $region2: #{tpu_custom_call.1} parent=1 // pred_check
      _
    $region3: #{tpu_custom_call.1} parent=1 // pred_check_branch
      %17 = sbr.rel (0) target = $region5
    $region4: #{tpu_custom_call.1} parent=1 // pred_region
      %s19 = ssub.s32 256, 256
      %20 = vsyncadd [#allocation3], %s19
      %s22 = sshll.u32 [#allocation2], 4
      %s23 = int_to_ptr.vmem [resolvable:$true] %s22
      %25 = dma.hbm_to_vmem [thread:$0]  %s0, 256, %s23, [#allocation3]
    $region5: #{tpu_custom_call.1} parent=1 // pred_fallthru
      _
    // Predicated region
    $region6: #{tpu_custom_call.1} parent=1 // pred_check
      _
    $region7: #{tpu_custom_call.1} parent=1 // pred_check_branch
      %27 = sbr.rel (0) target = $region9
    $region8: #{tpu_custom_call.1} parent=1 // pred_region
      %s29 = ssub.s32 1728, 1728
      %30 = vsyncadd [#allocation6], %s29
      %s31 = sshll.u32 [#allocation5], 4
      %s32 = int_to_ptr.vmem [resolvable:$true] %s31
      %37 = dma.hbm_to_vmem [thread:$0]  %s1, 1728, %s32, [#allocation6], 64, 64, 4
    $region9: #{tpu_custom_call.1} parent=1 // pred_fallthru
      _
    // Predicated region
    $region10: #{tpu_custom_call.1} parent=1 // pred_check
      _
    $region11: #{tpu_custom_call.1} parent=1 // pred_check_branch
      %39 = sbr.rel (0) target = $region13
    $region12: #{tpu_custom_call.1} parent=1 // pred_region
      _
    $region13: #{tpu_custom_call.1} parent=1 // pred_fallthru
      _
    // Predicated region
    $region14: #{tpu_custom_call.1} parent=1 // pred_check
      _
    $region15: #{tpu_custom_call.1} parent=1 // pred_check_branch
      %41 = sbr.rel (0) target = $region17
    $region16: #{tpu_custom_call.1} parent=1 // pred_region
      %s43 = ssub.s32 1024, 1024
      %44 = vsyncadd [#allocation6], %s43
      %s45 = sshll.u32 [#allocation7], 4
      %s46 = int_to_ptr.vmem [resolvable:$true] %s45
      %51 = dma.hbm_to_vmem [thread:$0]  %s3, 1024, %s46, [#allocation6], 64, 64, 4
    $region17: #{tpu_custom_call.1} parent=1 // pred_fallthru
      _
    // Predicated region
    $region18: #{tpu_custom_call.1} parent=1 // pred_check
      _
    $region19: #{tpu_custom_call.1} parent=1 // pred_check_branch
      %53 = sbr.rel (0) target = $region21
    $region20: #{tpu_custom_call.1} parent=1 // pred_region
      _
    $region21: #{tpu_custom_call.1} parent=1 // pred_fallthru
      _
    // Predicated region
    $region22: #{tpu_custom_call.1} parent=1 // pred_check
      _
    $region23: #{tpu_custom_call.1} parent=1 // pred_check_branch
      %55 = sbr.rel (0) target = $region25
    $region24: #{tpu_custom_call.1} parent=1 // pred_region
      %s57 = ssub.s32 1024, 1024
      %58 = vsyncadd [#allocation9], %s57
      %s59 = sshll.u32 [#allocation8], 4
      %s60 = int_to_ptr.vmem [resolvable:$true] %s59
      %65 = dma.hbm_to_vmem [thread:$0]  %s5, 1024, %s60, [#allocation9], 64, 64, 4
    $region25: #{tpu_custom_call.1} parent=1 // pred_fallthru
      _
    // Predicated region
    $region26: #{tpu_custom_call.1} parent=1 // pred_check
      _
    $region27: #{tpu_custom_call.1} parent=1 // pred_check_branch
      %67 = sbr.rel (0) target = $region29
    $region28: #{tpu_custom_call.1} parent=1 // pred_region
      _
    $region29: #{tpu_custom_call.1} parent=1 // pred_fallthru
      _
    // Predicated region
    $region30: #{tpu_custom_call.1} parent=1 // pred_check
      _
    $region31: #{tpu_custom_call.1} parent=1 // pred_check_branch
      %69 = sbr.rel (0) target = $region33
    $region32: #{tpu_custom_call.1} parent=1 // pred_region
      %70 = dma.done [#allocation3], 256
    $region33: #{tpu_custom_call.1} parent=1 // pred_fallthru
      _
    // Predicated region
    $region34: #{tpu_custom_call.1} parent=1 // pred_check
      _
    $region35: #{tpu_custom_call.1} parent=1 // pred_check_branch
      %72 = sbr.rel (0) target = $region37
    $region36: #{tpu_custom_call.1} parent=1 // pred_region
      %73 = dma.done [#allocation6], 1728
    $region37: #{tpu_custom_call.1} parent=1 // pred_fallthru
      _
    // Predicated region
    $region38: #{tpu_custom_call.1} parent=1 // pred_check
      _
    $region39: #{tpu_custom_call.1} parent=1 // pred_check_branch
      %75 = sbr.rel (0) target = $region41
    $region40: #{tpu_custom_call.1} parent=1 // pred_region
      %76 = dma.done [#allocation6], 1024
    $region41: #{tpu_custom_call.1} parent=1 // pred_fallthru
      _
    // Predicated region
    $region42: #{tpu_custom_call.1} parent=1 // pred_check
      _
    $region43: #{tpu_custom_call.1} parent=1 // pred_check_branch
      %78 = sbr.rel (0) target = $region45
    $region44: #{tpu_custom_call.1} parent=1 // pred_region
      %79 = dma.done [#allocation9], 1024
    $region45: #{tpu_custom_call.1} parent=1 // pred_fallthru
      _
    %v81 = vld [vmem:[#allocation2] sm:$0xff]
    %v82 = vld [vmem:[#allocation2 + $0x8] sm:$0xff]
    %v83 = vpack.c.bf16 %v81, %v81
    %v84 = vpack.c.bf16 %v82, %v82
    %v85 = vld [vmem:[#allocation5] sm:$0xf]
    %v86 = vld [vmem:[#allocation5 + $0x4] sm:$0xf]
    %v87 = vld [vmem:[#allocation5 + $0x8] sm:$0xf]
    %v88 = vld [vmem:[#allocation5 + $0xc] sm:$0xf]
    %v89 = vld [vmem:[#allocation5 + $0x10] sm:$0xf]
    %v90 = vld [vmem:[#allocation5 + $0x14] sm:$0xf]
    %v91 = vld [vmem:[#allocation5 + $0x18] sm:$0xf]
    %v92 = vld [vmem:[#allocation5 + $0x1c] sm:$0xf]
    %v93 = vld [vmem:[#allocation5 + $0x20] sm:$0xf]
    %v94 = vld [vmem:[#allocation5 + $0x24] sm:$0xf]
    %v95 = vld [vmem:[#allocation5 + $0x28] sm:$0xf]
    %v96 = vld [vmem:[#allocation5 + $0x2c] sm:$0xf]
    %v97 = vld [vmem:[#allocation5 + $0x30] sm:$0xf]
    %v98 = vld [vmem:[#allocation5 + $0x34] sm:$0xf]
    %v99 = vld [vmem:[#allocation5 + $0x38] sm:$0xf]
    %v100 = vld [vmem:[#allocation5 + $0x3c] sm:$0xf]
    %v101 = vld [vmem:[#allocation5 + $0x40] sm:$0xf]
    %v102 = vld [vmem:[#allocation5 + $0x44] sm:$0xf]
    %v103 = vld [vmem:[#allocation5 + $0x48] sm:$0xf]
    %v104 = vld [vmem:[#allocation5 + $0x4c] sm:$0xf]
    %v105 = vld [vmem:[#allocation5 + $0x50] sm:$0xf]
    %v106 = vld [vmem:[#allocation5 + $0x54] sm:$0xf]
    %v107 = vld [vmem:[#allocation5 + $0x58] sm:$0xf]
    %v108 = vld [vmem:[#allocation5 + $0x5c] sm:$0xf]
    %v109 = vld [vmem:[#allocation5 + $0x60] sm:$0xf]
    %v110 = vld [vmem:[#allocation5 + $0x64] sm:$0xf]
    %v111 = vld [vmem:[#allocation5 + $0x68] sm:$0x1]
    %v112 = vld [vmem:[%s2] sm:$0x1]
    %v114 = vlaneseq
    %v115 = vshrl.u32 %v114, 7
    %v116 = vsub.s32 0, %v115
    %v117 = vrot.slane %v112, %v116
    %v146 = vunpack.c.l.b16 %v85
    %v147 = vunpack.c.l.b16 %v86
    %v148 = vunpack.c.l.b16 %v87
    %v149 = vunpack.c.l.b16 %v88
    %v150 = vunpack.c.l.b16 %v89
    %v151 = vunpack.c.l.b16 %v90
    %v152 = vunpack.c.l.b16 %v91
    %v153 = vunpack.c.l.b16 %v92
    %v154 = vunpack.c.l.b16 %v93
    %v155 = vunpack.c.l.b16 %v94
    %v156 = vunpack.c.l.b16 %v95
    %v157 = vunpack.c.l.b16 %v96
    %v158 = vunpack.c.l.b16 %v97
    %v159 = vunpack.c.l.b16 %v98
    %v160 = vunpack.c.l.b16 %v99
    %v161 = vunpack.c.l.b16 %v100
    %v162 = vunpack.c.l.b16 %v101
    %v163 = vunpack.c.l.b16 %v102
    %v164 = vunpack.c.l.b16 %v103
    %v165 = vunpack.c.l.b16 %v104
    %v166 = vunpack.c.l.b16 %v105
    %v167 = vunpack.c.l.b16 %v106
    %v168 = vunpack.c.l.b16 %v107
    %v169 = vunpack.c.l.b16 %v108
    %v170 = vunpack.c.l.b16 %v109
    %v171 = vunpack.c.l.b16 %v110
    %v172 = vunpack.c.l.b16 %v111
    %v173 = vpack.c.b16 %v147, %v146
    %v174 = vpack.c.b16 %v149, %v148
    %v175 = vpack.c.b16 %v151, %v150
    %v176 = vpack.c.b16 %v153, %v152
    %v177 = vpack.c.b16 %v155, %v154
    %v178 = vpack.c.b16 %v157, %v156
    %v179 = vpack.c.b16 %v159, %v158
    %v180 = vpack.c.b16 %v161, %v160
    %v181 = vpack.c.b16 %v163, %v162
    %v182 = vpack.c.b16 %v165, %v164
    %v183 = vpack.c.b16 %v167, %v166
    %v184 = vpack.c.b16 %v169, %v168
    %v185 = vpack.c.b16 %v171, %v170
    %v186 = vpack.c.b16 %v172, %v172
    %vm200 = vcmask 670720
    %v202 = vsel %vm200, %v84, 0
    %vm204 = vcmask 1040384
    %v206 = vsel %vm204, %v186, 0
    %208 = vmatprep.subr.bf16.mxu0 0
    %209 = vmatpush1.bf16.msra.mxu0 %v173
    %210 = vmatprep.subr.bf16.mxu0 0
    %211 = vmatpush1.bf16.msra.mxu0 %v174
    %212 = vmatprep.subr.bf16.mxu0 0
    %213 = vmatpush1.bf16.msra.mxu0 %v175
    %214 = vmatprep.subr.bf16.mxu0 0
    %215 = vmatpush1.bf16.msra.mxu0 %v176
    %216 = vmatprep.subr.bf16.mxu0 0
    %217 = vmatpush1.bf16.msra.mxu0 %v177
    %218 = vmatprep.subr.bf16.mxu0 0
    %219 = vmatpush1.bf16.msra.mxu0 %v178
    %220 = vmatprep.subr.bf16.mxu0 0
    %221 = vmatpush1.bf16.msra.mxu0 %v179
    %222 = vmatprep.subr.bf16.mxu0 0
    %223 = vmatpush1.bf16.msra.mxu0 %v180
    %224 = vmatprep.subr.bf16.mxu0 0
    %225 = vmatpush1.bf16.msra.mxu0 %v181
    %226 = vmatprep.subr.bf16.mxu0 0
    %227 = vmatpush1.bf16.msra.mxu0 %v182
    %228 = vmatprep.subr.bf16.mxu0 0
    %229 = vmatpush1.bf16.msra.mxu0 %v183
    %230 = vmatprep.subr.bf16.mxu0 0
    %231 = vmatpush1.bf16.msra.mxu0 %v184
    %232 = vmatprep.subr.bf16.mxu0 0
    %233 = vmatpush1.bf16.msra.mxu0 %v185
    %234 = vmatprep.subr.bf16.mxu0 0
    %235 = vmatpush1.bf16.msra.mxu0 %v206
    %236 = vmatprep.subr.bf16.mxu0 0
    %237 = vmatpush1.bf16.msra.mxu0 0
    %238 = vmatprep.subr.bf16.mxu0 0
    %239 = vmatpush1.bf16.msra.mxu0 0
    %240 = vmatprep.mubr.bf16.mxu0 %v202
    %241 = vmatmul.mubr.bf16.gmra.mrb[0].mxu0 %v83
    %v242 = vpop.f32.mrb[0].mxu0
    %v243 = vadd.f32 %v117, %v242
    %v244 = vpop.f32.mrb[0].mxu0
    %v245 = vpop.f32.mrb[0].mxu0
    %v246 = vpop.f32.mrb[0].mxu0
    %247 = vdwg.mxu0
    %vm248 = vcmp.gt.f32.partialorder %v243, 0.0
    %v249 = vmul.f32 %v243, 0.01
    %v250 = vsel %vm248, %v243, %v249
    %v251 = vpack.c.bf16 %v250, %v250
    %v252 = vld [vmem:[#allocation7] sm:$0xf]
    %v253 = vld [vmem:[#allocation7 + $0x4] sm:$0xf]
    %v254 = vld [vmem:[#allocation7 + $0x8] sm:$0xf]
    %v255 = vld [vmem:[#allocation7 + $0xc] sm:$0xf]
    %v256 = vld [vmem:[#allocation7 + $0x10] sm:$0xf]
    %v257 = vld [vmem:[#allocation7 + $0x14] sm:$0xf]
    %v258 = vld [vmem:[#allocation7 + $0x18] sm:$0xf]
    %v259 = vld [vmem:[#allocation7 + $0x1c] sm:$0xf]
    %v260 = vld [vmem:[#allocation7 + $0x20] sm:$0xf]
    %v261 = vld [vmem:[#allocation7 + $0x24] sm:$0xf]
    %v262 = vld [vmem:[#allocation7 + $0x28] sm:$0xf]
    %v263 = vld [vmem:[#allocation7 + $0x2c] sm:$0xf]
    %v264 = vld [vmem:[#allocation7 + $0x30] sm:$0xf]
    %v265 = vld [vmem:[#allocation7 + $0x34] sm:$0xf]
    %v266 = vld [vmem:[#allocation7 + $0x38] sm:$0xf]
    %v267 = vld [vmem:[#allocation7 + $0x3c] sm:$0xf]
    %v268 = vld [vmem:[%s4] sm:$0x1]
    %v270 = vlaneseq
    %v271 = vshrl.u32 %v270, 7
    %v272 = vsub.s32 0, %v271
    %v273 = vrot.slane %v268, %v272
    %v291 = vunpack.c.l.b16 %v252
    %v292 = vunpack.c.l.b16 %v253
    %v293 = vunpack.c.l.b16 %v254
    %v294 = vunpack.c.l.b16 %v255
    %v295 = vunpack.c.l.b16 %v256
    %v296 = vunpack.c.l.b16 %v257
    %v297 = vunpack.c.l.b16 %v258
    %v298 = vunpack.c.l.b16 %v259
    %v299 = vunpack.c.l.b16 %v260
    %v300 = vunpack.c.l.b16 %v261
    %v301 = vunpack.c.l.b16 %v262
    %v302 = vunpack.c.l.b16 %v263
    %v303 = vunpack.c.l.b16 %v264
    %v304 = vunpack.c.l.b16 %v265
    %v305 = vunpack.c.l.b16 %v266
    %v306 = vunpack.c.l.b16 %v267
    %v307 = vpack.c.b16 %v292, %v291
    %v308 = vpack.c.b16 %v294, %v293
    %v309 = vpack.c.b16 %v296, %v295
    %v310 = vpack.c.b16 %v298, %v297
    %v311 = vpack.c.b16 %v300, %v299
    %v312 = vpack.c.b16 %v302, %v301
    %v313 = vpack.c.b16 %v304, %v303
    %v314 = vpack.c.b16 %v306, %v305
    %323 = vmatprep.subr.bf16.mxu0 0
    %324 = vmatpush1.bf16.msra.mxu0 %v307
    %325 = vmatprep.subr.bf16.mxu0 0
    %326 = vmatpush1.bf16.msra.mxu0 %v308
    %327 = vmatprep.subr.bf16.mxu0 0
    %328 = vmatpush1.bf16.msra.mxu0 %v309
    %329 = vmatprep.subr.bf16.mxu0 0
    %330 = vmatpush1.bf16.msra.mxu0 %v310
    %331 = vmatprep.subr.bf16.mxu0 0
    %332 = vmatpush1.bf16.msra.mxu0 %v311
    %333 = vmatprep.subr.bf16.mxu0 0
    %334 = vmatpush1.bf16.msra.mxu0 %v312
    %335 = vmatprep.subr.bf16.mxu0 0
    %336 = vmatpush1.bf16.msra.mxu0 %v313
    %337 = vmatprep.subr.bf16.mxu0 0
    %338 = vmatpush1.bf16.msra.mxu0 %v314
    %339 = vmatprep.subr.bf16.mxu0 0
    %340 = vmatpush1.bf16.msra.mxu0 0
    %341 = vmatprep.subr.bf16.mxu0 0
    %342 = vmatpush1.bf16.msra.mxu0 0
    %343 = vmatprep.subr.bf16.mxu0 0
    %344 = vmatpush1.bf16.msra.mxu0 0
    %345 = vmatprep.subr.bf16.mxu0 0
    %346 = vmatpush1.bf16.msra.mxu0 0
    %347 = vmatprep.subr.bf16.mxu0 0
    %348 = vmatpush1.bf16.msra.mxu0 0
    %349 = vmatprep.subr.bf16.mxu0 0
    %350 = vmatpush1.bf16.msra.mxu0 0
    %351 = vmatprep.subr.bf16.mxu0 0
    %352 = vmatpush1.bf16.msra.mxu0 0
    %353 = vmatprep.subr.bf16.mxu0 0
    %354 = vmatpush1.bf16.msra.mxu0 0
    %355 = vmatprep.mubr.bf16.mxu0 0
    %356 = vmatmul.mubr.bf16.gmra.mrb[0].mxu0 %v251
    %v357 = vpop.f32.mrb[0].mxu0
    %v358 = vadd.f32 %v273, %v357
    %v359 = vpop.f32.mrb[0].mxu0
    %v360 = vpop.f32.mrb[0].mxu0
    %v361 = vpop.f32.mrb[0].mxu0
    %362 = vdwg.mxu0
    %vm363 = vcmp.gt.f32.partialorder %v358, 0.0
    %v364 = vmul.f32 %v358, 0.01
    %v365 = vsel %vm363, %v358, %v364
    %v366 = vpack.c.bf16 %v365, %v365
    %v367 = vld [vmem:[#allocation8] sm:$0xf]
    %v368 = vld [vmem:[#allocation8 + $0x4] sm:$0xf]
    %v369 = vld [vmem:[#allocation8 + $0x8] sm:$0xf]
    %v370 = vld [vmem:[#allocation8 + $0xc] sm:$0xf]
    %v371 = vld [vmem:[#allocation8 + $0x10] sm:$0xf]
    %v372 = vld [vmem:[#allocation8 + $0x14] sm:$0xf]
    %v373 = vld [vmem:[#allocation8 + $0x18] sm:$0xf]
    %v374 = vld [vmem:[#allocation8 + $0x1c] sm:$0xf]
    %v375 = vld [vmem:[#allocation8 + $0x20] sm:$0xf]
    %v376 = vld [vmem:[#allocation8 + $0x24] sm:$0xf]
    %v377 = vld [vmem:[#allocation8 + $0x28] sm:$0xf]
    %v378 = vld [vmem:[#allocation8 + $0x2c] sm:$0xf]
    %v379 = vld [vmem:[#allocation8 + $0x30] sm:$0xf]
    %v380 = vld [vmem:[#allocation8 + $0x34] sm:$0xf]
    %v381 = vld [vmem:[#allocation8 + $0x38] sm:$0xf]
    %v382 = vld [vmem:[#allocation8 + $0x3c] sm:$0xf]
    %v383 = vld [vmem:[%s6] sm:$0x1]
    %v385 = vlaneseq
    %v386 = vshrl.u32 %v385, 7
    %v387 = vsub.s32 0, %v386
    %v388 = vrot.slane %v383, %v387
    %v406 = vunpack.c.l.b16 %v367
    %v407 = vunpack.c.l.b16 %v368
    %v408 = vunpack.c.l.b16 %v369
    %v409 = vunpack.c.l.b16 %v370
    %v410 = vunpack.c.l.b16 %v371
    %v411 = vunpack.c.l.b16 %v372
    %v412 = vunpack.c.l.b16 %v373
    %v413 = vunpack.c.l.b16 %v374
    %v414 = vunpack.c.l.b16 %v375
    %v415 = vunpack.c.l.b16 %v376
    %v416 = vunpack.c.l.b16 %v377
    %v417 = vunpack.c.l.b16 %v378
    %v418 = vunpack.c.l.b16 %v379
    %v419 = vunpack.c.l.b16 %v380
    %v420 = vunpack.c.l.b16 %v381
    %v421 = vunpack.c.l.b16 %v382
    %v422 = vpack.c.b16 %v407, %v406
    %v423 = vpack.c.b16 %v409, %v408
    %v424 = vpack.c.b16 %v411, %v410
    %v425 = vpack.c.b16 %v413, %v412
    %v426 = vpack.c.b16 %v415, %v414
    %v427 = vpack.c.b16 %v417, %v416
    %v428 = vpack.c.b16 %v419, %v418
    %v429 = vpack.c.b16 %v421, %v420
    %438 = vmatprep.subr.bf16.mxu0 0
    %439 = vmatpush1.bf16.msra.mxu0 %v422
    %440 = vmatprep.subr.bf16.mxu0 0
    %441 = vmatpush1.bf16.msra.mxu0 %v423
    %442 = vmatprep.subr.bf16.mxu0 0
    %443 = vmatpush1.bf16.msra.mxu0 %v424
    %444 = vmatprep.subr.bf16.mxu0 0
    %445 = vmatpush1.bf16.msra.mxu0 %v425
    %446 = vmatprep.subr.bf16.mxu0 0
    %447 = vmatpush1.bf16.msra.mxu0 %v426
    %448 = vmatprep.subr.bf16.mxu0 0
    %449 = vmatpush1.bf16.msra.mxu0 %v427
    %450 = vmatprep.subr.bf16.mxu0 0
    %451 = vmatpush1.bf16.msra.mxu0 %v428
    %452 = vmatprep.subr.bf16.mxu0 0
    %453 = vmatpush1.bf16.msra.mxu0 %v429
    %454 = vmatprep.subr.bf16.mxu0 0
    %455 = vmatpush1.bf16.msra.mxu0 0
    %456 = vmatprep.subr.bf16.mxu0 0
    %457 = vmatpush1.bf16.msra.mxu0 0
    %458 = vmatprep.subr.bf16.mxu0 0
    %459 = vmatpush1.bf16.msra.mxu0 0
    %460 = vmatprep.subr.bf16.mxu0 0
    %461 = vmatpush1.bf16.msra.mxu0 0
    %462 = vmatprep.subr.bf16.mxu0 0
    %463 = vmatpush1.bf16.msra.mxu0 0
    %464 = vmatprep.subr.bf16.mxu0 0
    %465 = vmatpush1.bf16.msra.mxu0 0
    %466 = vmatprep.subr.bf16.mxu0 0
    %467 = vmatpush1.bf16.msra.mxu0 0
    %468 = vmatprep.subr.bf16.mxu0 0
    %469 = vmatpush1.bf16.msra.mxu0 0
    %470 = vmatprep.mubr.bf16.mxu0 0
    %471 = vmatmul.mubr.bf16.gmra.mrb[0].mxu0 %v366
    %v472 = vpop.f32.mrb[0].mxu0
    %v473 = vadd.f32 %v388, %v472
    %v474 = vpop.f32.mrb[0].mxu0
    %v475 = vpop.f32.mrb[0].mxu0
    %v476 = vpop.f32.mrb[0].mxu0
    %477 = vdwg.mxu0
    %vm478 = vcmask 80896
    %479 = vst.msk [vmem:[#allocation10] sm:$0xff] %vm478, %v473
    // Predicated region
    $region46: #{tpu_custom_call.1} parent=1 // pred_check
      _
    $region47: #{tpu_custom_call.1} parent=1 // pred_check_branch
      %481 = sbr.rel (0) target = $region49
    $region48: #{tpu_custom_call.1} parent=1 // pred_region
      %s483 = ssub.s32 128, 128
      %484 = vsyncadd [#allocation4], %s483
      %s486 = sshll.u32 [#allocation10], 4
      %s487 = int_to_ptr.vmem [resolvable:$true] %s486
      %489 = dma.vmem_to_hbm [thread:$0]  %s487, 128, %s7, [#allocation4]
    $region49: #{tpu_custom_call.1} parent=1 // pred_fallthru
      _
    // Predicated region
    $region50: #{tpu_custom_call.1} parent=1 // pred_check
      _
    $region51: #{tpu_custom_call.1} parent=1 // pred_check_branch
      %491 = sbr.rel (0) target = $region53
    $region52: #{tpu_custom_call.1} parent=1 // pred_region
      %492 = dma.done [#allocation4], 128
    $region53: #{tpu_custom_call.1} parent=1 // pred_fallthru
      _
    %493 = vsyncpa [#allocation3], 1
    %494 = vsyncpa [#allocation6], 1
    %495 = vsyncpa [#allocation9], 1
    %496 = vsyncpa [#allocation4], 1

</llo_original>
